<compile_context>
chip_gen: v6e
topology: v6e:2x2x1
jax: 0.10.0
libtpu: 0.0.40
codegen_flags: <defaults>
</compile_context>

<pallas_src>
import functools

import jax
import jax.numpy as jnp
from jax import lax
from jax.experimental import pallas as pl
from jax.experimental.pallas import tpu as pltpu

LANE = 128                       # lane width (vreg minor dim)
SUB = 8                          # sublane granule
BYTES_PER_INPUT_PER_STEP = 4 << 20   # 4 MiB of each input per grid step


def _pearson_sums_kernel(shift_ref, target_ref, logit_ref, acc_ref, *,
                         block_rows, rows, n, grid):
    """Accumulate five reduction planes for Pearson correlation.

    acc_ref (output, VMEM-resident across the grid axis): f32 (5, 8, 128)
      [0]=sum(t'), [1]=sum(l'), [2]=sum(t'l'), [3]=sum(t't'), [4]=sum(l'l')
    where t' = t - t[0], l' = l - l[0] (shift-invariant statistics).
    """
    i = pl.program_id(0)

    @pl.when(i == 0)
    def _init():
        acc_ref[...] = jnp.zeros_like(acc_ref)

    # Hoisted broadcasts (JAX does not CSE broadcast_in_dim; do it once).
    shift_t = jnp.broadcast_to(shift_ref[0], (SUB, LANE))
    shift_l = jnp.broadcast_to(shift_ref[1], (SUB, LANE))

    def load_slabs(row_start):
        t = target_ref[pl.ds(row_start, SUB), :].astype(jnp.float32) - shift_t
        l = logit_ref[pl.ds(row_start, SUB), :].astype(jnp.float32) - shift_l
        return t, l

    def accum(carry, t, l):
        st, sl, stl, stt, sll = carry
        return (st + t, sl + l, stl + t * l, stt + t * t, sll + l * l)

    def body(s, carry):
        row_start = pl.multiple_of(s * SUB, SUB)
        t, l = load_slabs(row_start)
        return accum(carry, t, l)

    def run_block(n_full_slabs, masked_slab):
        carry = tuple(jnp.zeros((SUB, LANE), jnp.float32) for _ in range(5))
        if n_full_slabs > 0:
            carry = lax.fori_loop(0, n_full_slabs, body, carry,
                                  unroll=min(8, n_full_slabs))
        if masked_slab is not None:
            slab_idx, global_row0 = masked_slab          # static Python ints
            row_ids = lax.broadcasted_iota(jnp.int32, (SUB, LANE), 0)
            col_ids = lax.broadcasted_iota(jnp.int32, (SUB, LANE), 1)
            global_row = global_row0 + row_ids
            full_rows = n // LANE        # rows fully filled with real data
            rem_lanes = n % LANE         # valid lanes of the final partial row
            valid = (global_row < full_rows) | (
                (global_row == full_rows) & (col_ids < rem_lanes))
            t, l = load_slabs(slab_idx * SUB)
            # SELECT, not multiply-by-0: stale VMEM past the array end may
            # hold NaN/Inf bit patterns; a select is robust.
            t = jnp.where(valid, t, 0.0)
            l = jnp.where(valid, l, 0.0)
            carry = accum(carry, t, l)
        for k in range(5):
            acc_ref[k] += carry[k]

    # Static tail geometry (everything below is Python-time arithmetic).
    tail_rows = rows - (grid - 1) * block_rows     # valid rows in last block
    tail_slabs = -(-tail_rows // SUB)
    tail_needs_mask = (tail_rows % SUB != 0) or (n % LANE != 0)
    if tail_needs_mask:
        tail_full = tail_slabs - 1
        tail_masked = (tail_slabs - 1,
                       (grid - 1) * block_rows + (tail_slabs - 1) * SUB)
    else:
        tail_full = tail_slabs
        tail_masked = None

    if grid == 1:
        run_block(tail_full, tail_masked)
    elif tail_rows == block_rows and not tail_needs_mask:
        # Every block (including the last) is full and fully valid.
        run_block(block_rows // SUB, None)
    else:
        # Masking cost is confined to the LAST grid step only.
        @pl.when(i != grid - 1)
        def _full():
            run_block(block_rows // SUB, None)

        @pl.when(i == grid - 1)
        def _tail():
            run_block(tail_full, tail_masked)


def pearson_loss(logit, target, reduction="none"):
    assert logit.shape == target.shape, "logit/target shapes must match"
    n = int(logit.size)
    assert n > 0

    flat_l = logit.reshape(-1)
    flat_t = target.reshape(-1)

    # Shift values (first element of each tensor) for the numerically robust
    # single pass; Pearson correlation is invariant to per-tensor shifts.
    shifts = jnp.stack([flat_t[0], flat_l[0]]).astype(jnp.float32)  # (2,)

    if n % LANE != 0:
        # TODO(synk): rare path (n not a multiple of 128) still pays a full
        # HBM copy via pad; a manual 1-D DMA kernel would avoid it.
        pad = LANE - n % LANE
        flat_l = jnp.pad(flat_l, (0, pad))
        flat_t = jnp.pad(flat_t, (0, pad))

    rows = flat_l.size // LANE      # free reshape when n % 128 == 0
    t2 = flat_t.reshape(rows, LANE)
    l2 = flat_l.reshape(rows, LANE)

    # Byte-budgeted block: ~4 MiB per input per grid step regardless of dtype.
    itemsize = t2.dtype.itemsize
    max_block_rows = max(
        SUB, (BYTES_PER_INPUT_PER_STEP // (LANE * itemsize)) // SUB * SUB)
    if rows <= max_block_rows:
        block_rows, grid = rows, 1          # full-dim block (any row count ok)
    else:
        block_rows = max_block_rows         # multiple of 8
        grid = -(-rows // block_rows)

    kernel = functools.partial(_pearson_sums_kernel, block_rows=block_rows,
                               rows=rows, n=n, grid=grid)

    sums = pl.pallas_call(
        kernel,
        out_shape=jax.ShapeDtypeStruct((5, SUB, LANE), jnp.float32),
        grid=(grid,),
        in_specs=[
            pl.BlockSpec(memory_space=pltpu.MemorySpace.SMEM),    # shifts (2,)
            pl.BlockSpec((block_rows, LANE), lambda i: (i, 0)),   # target
            pl.BlockSpec((block_rows, LANE), lambda i: (i, 0)),   # logit
        ],
        out_specs=pl.BlockSpec((5, SUB, LANE), lambda i: (0, 0, 0)),
        compiler_params=pltpu.CompilerParams(
            dimension_semantics=("arbitrary",),
            vmem_limit_bytes=32 * 1024 * 1024),
        cost_estimate=pl.CostEstimate(flops=10 * n, transcendentals=0,
                                      bytes_accessed=2 * n * itemsize),
    )(shifts, t2, l2)

    # Finalize (a handful of scalar ops) in plain JAX.
    s = jnp.sum(sums, axis=(1, 2))  # (5,)
    sum_t, sum_l, sum_tl, sum_tt, sum_ll = s[0], s[1], s[2], s[3], s[4]
    nf = jnp.float32(n)
    cov = sum_tl - sum_t * sum_l / nf
    var_t = jnp.maximum(sum_tt - sum_t * sum_t / nf, 0.0)
    var_l = jnp.maximum(sum_ll - sum_l * sum_l / nf, 0.0)
    loss = 1.0 - cov / (jnp.sqrt(var_t) * jnp.sqrt(var_l))

    # NOTE: the PyTorch module defines eps but never applies it in forward();
    # we mirror that.  A scalar loss makes mean/sum reductions identities.
    if reduction in ("none", "mean", "sum"):
        return loss
    raise NotImplementedError


def pearson_loss_ref(logit, target):
    """Plain-JAX reference mirroring the PyTorch forward exactly."""
    logit = logit.astype(jnp.float32)
    target = target.astype(jnp.float32)
    target_diff = target - jnp.mean(target)
    logit_diff = logit - jnp.mean(logit)
    return 1.0 - jnp.sum(target_diff * logit_diff) / (
        jnp.sqrt(jnp.sum(target_diff ** 2)) * jnp.sqrt(jnp.sum(logit_diff ** 2))
    )


if __name__ == "__main__":
    key = jax.random.PRNGKey(0)
    k1, k2 = jax.random.split(key)
    # NCHW-style inputs, small shapes (2, 4, 16, 16).
    logit = jax.random.normal(k1, (2, 4, 16, 16), dtype=jnp.float32)
    target = jax.random.normal(k2, (2, 4, 16, 16), dtype=jnp.float32)

    loss = pearson_loss(logit, target, reduction="none")
    loss = jax.block_until_ready(loss)

    ref = pearson_loss_ref(logit, target)
    assert jnp.allclose(loss, ref, rtol=1e-4, atol=1e-5), (loss, ref)

    print("KERNEL_OK")
</pallas_src>

<mosaic_0001>
module attributes {stable_mosaic.version = 11 : i64} {
  func.func @_pearson_sums_kernel(%arg0: i32, %arg1: memref<2xf32, #tpu.memory_space<smem>>, %arg2: memref<16x128xf32, #tpu.memory_space<vmem>>, %arg3: memref<16x128xf32, #tpu.memory_space<vmem>>, %arg4: memref<5x8x128xf32, #tpu.memory_space<vmem>>) attributes {dimension_semantics = [#tpu.dimension_semantics<arbitrary>], iteration_bounds = array<i64: 1>, scalar_prefetch = 0 : i64, scratch_operands = 0 : i64, tpu.core_type = #tpu.core_type<tc>, window_params = [{transform_indices = @transform_0, window_bounds = array<i64: 2>}, {transform_indices = @transform_1, window_bounds = array<i64: 16, 128>}, {transform_indices = @transform_2, window_bounds = array<i64: 16, 128>}, {pipeline_mode = #tpu.pipeline_mode<synchronous>, transform_indices = @transform_3, window_bounds = array<i64: 5, 8, 128>}]} {
    %c0_i32 = arith.constant 0 : i32
    %0 = arith.cmpi eq, %arg0, %c0_i32 : i32
    %1 = arith.extui %0 : i1 to i32
    %c0_i32_0 = arith.constant 0 : i32
    %2 = arith.cmpi ne, %1, %c0_i32_0 : i32
    scf.if %2 {
      %cst_38 = arith.constant 0.000000e+00 : f32
      %74 = vector.broadcast %cst_38 : f32 to vector<5x8x128xf32>
      %c0_39 = arith.constant 0 : index
      %c0_40 = arith.constant 0 : index
      %c0_41 = arith.constant 0 : index
      %75 = vector.load %arg4[%c0_39, %c0_40, %c0_41] : memref<5x8x128xf32, #tpu.memory_space<vmem>>, vector<5x8x128xf32>
      tpu.vector_store %arg4[%c0_39, %c0_40, %c0_41], %74 {strides = array<i32>} : memref<5x8x128xf32, #tpu.memory_space<vmem>>, vector<5x8x128xf32>,
    } else {
    }
    %c0 = arith.constant 0 : index
    %3 = memref.load %arg1[%c0] : memref<2xf32, #tpu.memory_space<smem>>
    %4 = vector.broadcast %3 : f32 to vector<8x128xf32>
    %c1 = arith.constant 1 : index
    %5 = memref.load %arg1[%c1] : memref<2xf32, #tpu.memory_space<smem>>
    %6 = vector.broadcast %5 : f32 to vector<8x128xf32>
    %cst = arith.constant 0.000000e+00 : f32
    %7 = vector.broadcast %cst : f32 to vector<8x128xf32>
    %cst_1 = arith.constant 0.000000e+00 : f32
    %8 = vector.broadcast %cst_1 : f32 to vector<8x128xf32>
    %cst_2 = arith.constant 0.000000e+00 : f32
    %9 = vector.broadcast %cst_2 : f32 to vector<8x128xf32>
    %cst_3 = arith.constant 0.000000e+00 : f32
    %10 = vector.broadcast %cst_3 : f32 to vector<8x128xf32>
    %cst_4 = arith.constant 0.000000e+00 : f32
    %11 = vector.broadcast %cst_4 : f32 to vector<8x128xf32>
    %c0_i32_5 = arith.constant 0 : i32
    %c8_i32 = arith.constant 8 : i32
    %12 = arith.muli %c0_i32_5, %c8_i32 : i32
    %13 = tpu.assume_multiple %12, 8 : i32
    %14 = arith.index_cast %13 : i32 to index
    %c0_6 = arith.constant 0 : index
    %15 = vector.load %arg2[%14, %c0_6] : memref<16x128xf32, #tpu.memory_space<vmem>>, vector<8x128xf32>
    %16 = arith.subf %15, %4 : vector<8x128xf32>
    %17 = arith.index_cast %13 : i32 to index
    %c0_7 = arith.constant 0 : index
    %18 = vector.load %arg3[%17, %c0_7] : memref<16x128xf32, #tpu.memory_space<vmem>>, vector<8x128xf32>
    %19 = arith.subf %18, %6 : vector<8x128xf32>
    %20 = arith.addf %7, %16 : vector<8x128xf32>
    %21 = arith.addf %8, %19 : vector<8x128xf32>
    %22 = arith.mulf %16, %19 : vector<8x128xf32>
    %23 = arith.addf %9, %22 : vector<8x128xf32>
    %24 = arith.mulf %16, %16 : vector<8x128xf32>
    %25 = arith.addf %10, %24 : vector<8x128xf32>
    %26 = arith.mulf %19, %19 : vector<8x128xf32>
    %27 = arith.addf %11, %26 : vector<8x128xf32>
    %c1_i32 = arith.constant 1 : i32
    %c8_i32_8 = arith.constant 8 : i32
    %28 = arith.muli %c1_i32, %c8_i32_8 : i32
    %29 = tpu.assume_multiple %28, 8 : i32
    %30 = arith.index_cast %29 : i32 to index
    %c0_9 = arith.constant 0 : index
    %31 = vector.load %arg2[%30, %c0_9] : memref<16x128xf32, #tpu.memory_space<vmem>>, vector<8x128xf32>
    %32 = arith.subf %31, %4 : vector<8x128xf32>
    %33 = arith.index_cast %29 : i32 to index
    %c0_10 = arith.constant 0 : index
    %34 = vector.load %arg3[%33, %c0_10] : memref<16x128xf32, #tpu.memory_space<vmem>>, vector<8x128xf32>
    %35 = arith.subf %34, %6 : vector<8x128xf32>
    %36 = arith.addf %20, %32 : vector<8x128xf32>
    %37 = arith.addf %21, %35 : vector<8x128xf32>
    %38 = arith.mulf %32, %35 : vector<8x128xf32>
    %39 = arith.addf %23, %38 : vector<8x128xf32>
    %40 = arith.mulf %32, %32 : vector<8x128xf32>
    %41 = arith.addf %25, %40 : vector<8x128xf32>
    %42 = arith.mulf %35, %35 : vector<8x128xf32>
    %43 = arith.addf %27, %42 : vector<8x128xf32>
    %c2_i32 = arith.constant 2 : i32
    %c0_11 = arith.constant 0 : index
    %c0_12 = arith.constant 0 : index
    %c0_13 = arith.constant 0 : index
    %44 = vector.load %arg4[%c0_11, %c0_12, %c0_13] : memref<5x8x128xf32, #tpu.memory_space<vmem>>, vector<1x8x128xf32>
    %45 = vector.shape_cast %44 : vector<1x8x128xf32> to vector<8x128xf32>
    %46 = arith.addf %45, %36 : vector<8x128xf32>
    %c0_14 = arith.constant 0 : index
    %c0_15 = arith.constant 0 : index
    %c0_16 = arith.constant 0 : index
    %47 = vector.load %arg4[%c0_14, %c0_15, %c0_16] : memref<5x8x128xf32, #tpu.memory_space<vmem>>, vector<1x8x128xf32>
    %48 = vector.shape_cast %47 : vector<1x8x128xf32> to vector<8x128xf32>
    %49 = vector.shape_cast %46 : vector<8x128xf32> to vector<1x8x128xf32>
    tpu.vector_store %arg4[%c0_14, %c0_15, %c0_16], %49 {strides = array<i32>} : memref<5x8x128xf32, #tpu.memory_space<vmem>>, vector<1x8x128xf32>,
    %c1_17 = arith.constant 1 : index
    %c0_18 = arith.constant 0 : index
    %c0_19 = arith.constant 0 : index
    %50 = vector.load %arg4[%c1_17, %c0_18, %c0_19] : memref<5x8x128xf32, #tpu.memory_space<vmem>>, vector<1x8x128xf32>
    %51 = vector.shape_cast %50 : vector<1x8x128xf32> to vector<8x128xf32>
    %52 = arith.addf %51, %37 : vector<8x128xf32>
    %c1_20 = arith.constant 1 : index
    %c0_21 = arith.constant 0 : index
    %c0_22 = arith.constant 0 : index
    %53 = vector.load %arg4[%c1_20, %c0_21, %c0_22] : memref<5x8x128xf32, #tpu.memory_space<vmem>>, vector<1x8x128xf32>
    %54 = vector.shape_cast %53 : vector<1x8x128xf32> to vector<8x128xf32>
    %55 = vector.shape_cast %52 : vector<8x128xf32> to vector<1x8x128xf32>
    tpu.vector_store %arg4[%c1_20, %c0_21, %c0_22], %55 {strides = array<i32>} : memref<5x8x128xf32, #tpu.memory_space<vmem>>, vector<1x8x128xf32>,
    %c2 = arith.constant 2 : index
    %c0_23 = arith.constant 0 : index
    %c0_24 = arith.constant 0 : index
    %56 = vector.load %arg4[%c2, %c0_23, %c0_24] : memref<5x8x128xf32, #tpu.memory_space<vmem>>, vector<1x8x128xf32>
    %57 = vector.shape_cast %56 : vector<1x8x128xf32> to vector<8x128xf32>
    %58 = arith.addf %57, %39 : vector<8x128xf32>
    %c2_25 = arith.constant 2 : index
    %c0_26 = arith.constant 0 : index
    %c0_27 = arith.constant 0 : index
    %59 = vector.load %arg4[%c2_25, %c0_26, %c0_27] : memref<5x8x128xf32, #tpu.memory_space<vmem>>, vector<1x8x128xf32>
    %60 = vector.shape_cast %59 : vector<1x8x128xf32> to vector<8x128xf32>
    %61 = vector.shape_cast %58 : vector<8x128xf32> to vector<1x8x128xf32>
    tpu.vector_store %arg4[%c2_25, %c0_26, %c0_27], %61 {strides = array<i32>} : memref<5x8x128xf32, #tpu.memory_space<vmem>>, vector<1x8x128xf32>,
    %c3 = arith.constant 3 : index
    %c0_28 = arith.constant 0 : index
    %c0_29 = arith.constant 0 : index
    %62 = vector.load %arg4[%c3, %c0_28, %c0_29] : memref<5x8x128xf32, #tpu.memory_space<vmem>>, vector<1x8x128xf32>
    %63 = vector.shape_cast %62 : vector<1x8x128xf32> to vector<8x128xf32>
    %64 = arith.addf %63, %41 : vector<8x128xf32>
    %c3_30 = arith.constant 3 : index
    %c0_31 = arith.constant 0 : index
    %c0_32 = arith.constant 0 : index
    %65 = vector.load %arg4[%c3_30, %c0_31, %c0_32] : memref<5x8x128xf32, #tpu.memory_space<vmem>>, vector<1x8x128xf32>
    %66 = vector.shape_cast %65 : vector<1x8x128xf32> to vector<8x128xf32>
    %67 = vector.shape_cast %64 : vector<8x128xf32> to vector<1x8x128xf32>
    tpu.vector_store %arg4[%c3_30, %c0_31, %c0_32], %67 {strides = array<i32>} : memref<5x8x128xf32, #tpu.memory_space<vmem>>, vector<1x8x128xf32>,
    %c4 = arith.constant 4 : index
    %c0_33 = arith.constant 0 : index
    %c0_34 = arith.constant 0 : index
    %68 = vector.load %arg4[%c4, %c0_33, %c0_34] : memref<5x8x128xf32, #tpu.memory_space<vmem>>, vector<1x8x128xf32>
    %69 = vector.shape_cast %68 : vector<1x8x128xf32> to vector<8x128xf32>
    %70 = arith.addf %69, %43 : vector<8x128xf32>
    %c4_35 = arith.constant 4 : index
    %c0_36 = arith.constant 0 : index
    %c0_37 = arith.constant 0 : index
    %71 = vector.load %arg4[%c4_35, %c0_36, %c0_37] : memref<5x8x128xf32, #tpu.memory_space<vmem>>, vector<1x8x128xf32>
    %72 = vector.shape_cast %71 : vector<1x8x128xf32> to vector<8x128xf32>
    %73 = vector.shape_cast %70 : vector<8x128xf32> to vector<1x8x128xf32>
    tpu.vector_store %arg4[%c4_35, %c0_36, %c0_37], %73 {strides = array<i32>} : memref<5x8x128xf32, #tpu.memory_space<vmem>>, vector<1x8x128xf32>,
    return
  }
  func.func @transform_0(%arg0: i32) -> i32 {
    %c0_i32 = arith.constant 0 : i32
    %c0_i32_0 = arith.constant 0 : i32
    return %c0_i32 : i32
  }
  func.func @transform_1(%arg0: i32) -> (i32, i32) {
    %c0_i32 = arith.constant 0 : i32
    %c0_i32_0 = arith.constant 0 : i32
    return %arg0, %c0_i32 : i32, i32
  }
  func.func @transform_2(%arg0: i32) -> (i32, i32) {
    %c0_i32 = arith.constant 0 : i32
    %c0_i32_0 = arith.constant 0 : i32
    return %arg0, %c0_i32 : i32, i32
  }
  func.func @transform_3(%arg0: i32) -> (i32, i32, i32) {
    %c0_i32 = arith.constant 0 : i32
    %c0_i32_0 = arith.constant 0 : i32
    %c0_i32_1 = arith.constant 0 : i32
    %c0_i32_2 = arith.constant 0 : i32
    return %c0_i32, %c0_i32_0, %c0_i32_1 : i32, i32, i32
  }
}

</mosaic_0001>

<llo_original>
// kernel: tpu_custom_call.1
$region0: #{tpu_custom_call.1}
  #allocation0 [shape = 'u32[]', space=smem, size = 0x4, offset = 0x4, fixed_abs, tag = 'smem constant byte address 0x4 - core index']
  #allocation1 [shape = 'u32[144,128]{1,0:T(1,128)}', space=vmem, size = 0x12000, scoped, tag = 'internal scratch']
  %s0 = inlined_call_operand.hbm [shape: f32[2], index: 0, kind: input, shape index: {}]
  %s1 = inlined_call_operand.hbm [shape: f32[16,128], index: 1, kind: input, shape index: {}]
  %s2 = inlined_call_operand.hbm [shape: f32[16,128], index: 2, kind: input, shape index: {}]
  %s3 = inlined_call_operand.hbm [shape: f32[5,8,128], index: 3, kind: output, shape index: {}]
  %s4 = sld [smem:[#allocation0]]
  $region38: #{tpu_custom_call.1} parent=0
    _
  %s6 = ssub.s32 1, %s4
  %s7 = scalar_select 0, %s6, %s4
  $region1: #{tpu_custom_call.1} parent=0
    #allocation2 [shape = 'u8[512]{0}', space=smem, size = 0x200, scoped, tag = 'input window, operand 0, single buffered']
    #allocation3 [shape = 's32[1]{0}', space=sflag, size = 0x4, scoped, tag = 'scoped memory for tpu_custom_call.1']
    #allocation4 [shape = 's32[1]{0}', space=sflag, size = 0x4, scoped, tag = 'scoped memory for tpu_custom_call.1']
    #allocation5 [shape = 's32[1]{0}', space=sflag, size = 0x4, scoped, tag = 'scoped memory for tpu_custom_call.1']
    #allocation6 [shape = 'u8[8192]{0}', space=vmem, size = 0x2000, scoped, tag = 'input window, operand 1, single buffered']
    #allocation7 [shape = 'u8[8192]{0}', space=vmem, size = 0x2000, scoped, tag = 'input window, operand 2, single buffered']
    #allocation8 [shape = 's32[1]{0}', space=sflag, size = 0x4, scoped, tag = 'scoped memory for tpu_custom_call.1']
    #allocation9 [shape = 'u8[20480]{0}', space=vmem, size = 0x5000, scoped, tag = 'output window, operand 0, single buffered']
    %8 = vsyncpa [#allocation5], 0
    %9 = vsyncpa [#allocation3], 0
    %10 = vsyncpa [#allocation8], 0
    %11 = vsyncpa [#allocation4], 0
    // Predicated region
    $region2: #{tpu_custom_call.1} parent=1 // pred_check
      _
    $region3: #{tpu_custom_call.1} parent=1 // pred_check_branch
      %13 = sbr.rel (0) target = $region5
    $region4: #{tpu_custom_call.1} parent=1 // pred_region
      %s15 = ssub.s32 16, 16
      %16 = vsyncadd [#allocation5], %s15
      %19 = dma.hbm_to_smem %s0, 16, [#allocation2], [#allocation5]
    $region5: #{tpu_custom_call.1} parent=1 // pred_fallthru
      _
    // Predicated region
    $region6: #{tpu_custom_call.1} parent=1 // pred_check
      _
    $region7: #{tpu_custom_call.1} parent=1 // pred_check_branch
      %21 = sbr.rel (0) target = $region9
    $region8: #{tpu_custom_call.1} parent=1 // pred_region
      %s23 = ssub.s32 256, 256
      %24 = vsyncadd [#allocation3], %s23
      %s25 = sshll.u32 [#allocation6], 4
      %s26 = int_to_ptr.vmem [resolvable:$true] %s25
      %31 = dma.hbm_to_vmem [thread:$0]  %s1, 256, %s26, [#allocation3], 128, 128, 8
    $region9: #{tpu_custom_call.1} parent=1 // pred_fallthru
      _
    // Predicated region
    $region10: #{tpu_custom_call.1} parent=1 // pred_check
      _
    $region11: #{tpu_custom_call.1} parent=1 // pred_check_branch
      %33 = sbr.rel (0) target = $region13
    $region12: #{tpu_custom_call.1} parent=1 // pred_region
      %s35 = ssub.s32 256, 256
      %36 = vsyncadd [#allocation8], %s35
      %s37 = sshll.u32 [#allocation7], 4
      %s38 = int_to_ptr.vmem [resolvable:$true] %s37
      %43 = dma.hbm_to_vmem [thread:$0]  %s2, 256, %s38, [#allocation8], 128, 128, 8
    $region13: #{tpu_custom_call.1} parent=1 // pred_fallthru
      _
    // Predicated region
    $region14: #{tpu_custom_call.1} parent=1 // pred_check
      _
    $region15: #{tpu_custom_call.1} parent=1 // pred_check_branch
      %45 = sbr.rel (0) target = $region17
    $region16: #{tpu_custom_call.1} parent=1 // pred_region
      %46 = dma.done [#allocation5], 16
    $region17: #{tpu_custom_call.1} parent=1 // pred_fallthru
      _
    // Predicated region
    $region18: #{tpu_custom_call.1} parent=1 // pred_check
      _
    $region19: #{tpu_custom_call.1} parent=1 // pred_check_branch
      %48 = sbr.rel (0) target = $region21
    $region20: #{tpu_custom_call.1} parent=1 // pred_region
      %49 = dma.done [#allocation3], 256
    $region21: #{tpu_custom_call.1} parent=1 // pred_fallthru
      _
    // Predicated region
    $region22: #{tpu_custom_call.1} parent=1 // pred_check
      _
    $region23: #{tpu_custom_call.1} parent=1 // pred_check_branch
      %51 = sbr.rel (0) target = $region25
    $region24: #{tpu_custom_call.1} parent=1 // pred_region
      %52 = dma.done [#allocation8], 256
    $region25: #{tpu_custom_call.1} parent=1 // pred_fallthru
      _
    %53 = sfence
    %p54 = scmp.eq.s32.totalorder 0, 0
    // Predicated region
    $region26: #{tpu_custom_call.1} parent=1 // pred_check
      %p55 = pneg %p54
    $region27: #{tpu_custom_call.1} parent=1 // pred_check_branch
      %57 = sbr.rel (%p55) target = $region29
    $region28: #{tpu_custom_call.1} parent=1 // pred_region
      %58 = vst [vmem:[#allocation9] sm:$0xff] 0.0
      %59 = vst [vmem:[#allocation9 + $0x8] sm:$0xff] 0.0
      %60 = vst [vmem:[#allocation9 + $0x10] sm:$0xff] 0.0
      %61 = vst [vmem:[#allocation9 + $0x18] sm:$0xff] 0.0
      %62 = vst [vmem:[#allocation9 + $0x20] sm:$0xff] 0.0
    $region29: #{tpu_custom_call.1} parent=1 // pred_fallthru
      _
    %s63 = sld [smem:[#allocation2]]
    %v64 = vstv %s63
    %s65 = sld [smem:[#allocation2 + $0x1]]
    %v66 = vstv %s65
    %v67 = vld [vmem:[#allocation6] sm:$0xff]
    %v68 = vsub.f32 %v67, %v64
    %v69 = vld [vmem:[#allocation7] sm:$0xff]
    %v70 = vsub.f32 %v69, %v66
    %v71 = vadd.f32 %v68, 0.0
    %v72 = vadd.f32 %v70, 0.0
    %v73 = vmul.f32 %v68, %v70
    %v74 = vadd.f32 %v73, 0.0
    %v75 = vmul.f32 %v68, %v68
    %v76 = vadd.f32 %v75, 0.0
    %v77 = vmul.f32 %v70, %v70
    %v78 = vadd.f32 %v77, 0.0
    %s79 = scalar_lea.vmem [#allocation6], 8
    %v80 = vld [vmem:[%s79] sm:$0xff]
    %v81 = vsub.f32 %v80, %v64
    %s82 = scalar_lea.vmem [#allocation7], 8
    %v83 = vld [vmem:[%s82] sm:$0xff]
    %v84 = vsub.f32 %v83, %v66
    %v85 = vadd.f32 %v71, %v81
    %v86 = vadd.f32 %v72, %v84
    %v87 = vmul.f32 %v81, %v84
    %v88 = vadd.f32 %v74, %v87
    %v89 = vmul.f32 %v81, %v81
    %v90 = vadd.f32 %v76, %v89
    %v91 = vmul.f32 %v84, %v84
    %v92 = vadd.f32 %v78, %v91
    %v93 = vld [vmem:[#allocation9] sm:$0xff]
    %v94 = vadd.f32 %v93, %v85
    %95 = vst [vmem:[#allocation9] sm:$0xff] %v94
    %s96 = scalar_lea.vmem [#allocation9], 8
    %v97 = vld [vmem:[%s96] sm:$0xff]
    %v98 = vadd.f32 %v97, %v86
    %99 = vst [vmem:[%s96] sm:$0xff] %v98
    %s100 = scalar_lea.vmem [#allocation9], 16
    %v101 = vld [vmem:[%s100] sm:$0xff]
    %v102 = vadd.f32 %v101, %v88
    %103 = vst [vmem:[%s100] sm:$0xff] %v102
    %s104 = scalar_lea.vmem [#allocation9], 24
    %v105 = vld [vmem:[%s104] sm:$0xff]
    %v106 = vadd.f32 %v105, %v90
    %107 = vst [vmem:[%s104] sm:$0xff] %v106
    %s108 = scalar_lea.vmem [#allocation9], 32
    %v109 = vld [vmem:[%s108] sm:$0xff]
    %v110 = vadd.f32 %v109, %v92
    %111 = vst [vmem:[%s108] sm:$0xff] %v110
    // Predicated region
    $region30: #{tpu_custom_call.1} parent=1 // pred_check
      _
    $region31: #{tpu_custom_call.1} parent=1 // pred_check_branch
      %113 = sbr.rel (0) target = $region33
    $region32: #{tpu_custom_call.1} parent=1 // pred_region
      %s115 = ssub.s32 640, 640
      %116 = vsyncadd [#allocation4], %s115
      %s117 = sshll.u32 [#allocation9], 4
      %s118 = int_to_ptr.vmem [resolvable:$true] %s117
      %123 = dma.vmem_to_hbm [thread:$0]  %s118, 640, %s3, [#allocation4], 128, 128, 8
    $region33: #{tpu_custom_call.1} parent=1 // pred_fallthru
      _
    // Predicated region
    $region34: #{tpu_custom_call.1} parent=1 // pred_check
      _
    $region35: #{tpu_custom_call.1} parent=1 // pred_check_branch
      %125 = sbr.rel (0) target = $region37
    $region36: #{tpu_custom_call.1} parent=1 // pred_region
      %126 = dma.done [#allocation4], 640
    $region37: #{tpu_custom_call.1} parent=1 // pred_fallthru
      _
    %127 = vsyncpa [#allocation3], 1
    %128 = vsyncpa [#allocation8], 1
    %129 = vsyncpa [#allocation4], 1
    %130 = vsyncpa [#allocation5], 1

</llo_original>
